<compile_context>
chip_gen: v7x
topology: tpu7x:2x2x1
jax: 0.10.0
libtpu: 0.0.40
codegen_flags: <defaults>
</compile_context>

<pallas_src>
import functools
import math

import jax
import jax.numpy as jnp
from jax.experimental import pallas as pl
from jax.experimental.pallas import tpu as pltpu


def _round_up(a: int, b: int) -> int:
    return (a + b - 1) // b * b


def _arcmargin_kernel(x_ref, w_ref, lab_ref, out_ref, *, s, cos_m, sin_m, tn):
    j = pl.program_id(1)                 # class-tile index

    x = x_ref[...]                       # (TB, D), input dtype
    w = w_ref[...]                       # (TN, D), input dtype
    lab = lab_ref[...]                   # (TB, 1)  int32

    # Row-wise L2 normalization (F.normalize, eps=1e-12); reductions in f32.
    xf = x.astype(jnp.float32)
    wf = w.astype(jnp.float32)
    x_inv = jnp.minimum(
        jax.lax.rsqrt(jnp.sum(xf * xf, axis=-1, keepdims=True)), 1e12)
    w_inv = jnp.minimum(
        jax.lax.rsqrt(jnp.sum(wf * wf, axis=-1, keepdims=True)), 1e12)
    xn = (xf * x_inv).astype(x.dtype)    # bf16 in -> bf16 MXU operand
    wn = (wf * w_inv).astype(w.dtype)

    # cosine = xn @ wn.T, expressed as a contraction over the shared feature
    # dim so the MXU consumes the (TN, D) tile directly (no transpose copy).
    cosine = jax.lax.dot_general(
        xn, wn, dimension_numbers=(((1,), (1,)), ((), ())),
        preferred_element_type=jnp.float32)                      # (TB, TN)
    cosine = jnp.clip(cosine, -1.0 + 1e-05, 1.0 - 1e-05)

    # One-hot mask for this class tile (at most one hit per row).
    tb = cosine.shape[0]
    class_ids = jax.lax.broadcasted_iota(jnp.int32, (tb, tn), 1)
    lab_local = lab - j * tn             # shift the (TB,1) labels, not the iota
    mask = class_ids == lab_local

    # phi only matters at the label column: extract that cosine per row via a
    # masked lane reduction (exact: <=1 nonzero per row), apply the margin to
    # a (TB, 1) column, and scatter it back with a select.  Keeps the big
    # (TB, TN) tile on VPU/MXU only; EUP sqrt count is O(TB) not O(TB*TN).
    row_cos = jnp.sum(jnp.where(mask, cosine, 0.0), axis=-1, keepdims=True)
    row_phi = (row_cos * cos_m
               - jnp.sqrt(1.0 - row_cos * row_cos + 1e-07) * sin_m)

    out = jnp.where(mask, row_phi, cosine)
    out_ref[...] = (out * s).astype(out_ref.dtype)


def arc_margin_product(x, weight, label, *, s=64.0, m=0.5, easy_margin=False,
                       tb=None, tn=None, out_dtype=jnp.float32):
    """ArcMarginProduct.forward.

    x:      (B, in_features)
    weight: (out_features, in_features)
    label:  (B,) int class indices
    returns (B, out_features) in `out_dtype`
    """
    del easy_margin  # the reference forward() does not use it
    B, D = x.shape
    N, D2 = weight.shape
    assert D == D2, "feature dims must match"

    # Tile sizes: batch rows in multiples of 8 (sublanes), classes in
    # multiples of 128 (lane-dense output stores / MXU columns).
    if tb is None:
        tb = 128 if B >= 128 else _round_up(B, 8)
    if tn is None:
        tn = 512 if N >= 512 else _round_up(N, 128)
    assert tb % 8 == 0 and tn % 128 == 0

    Bp, Np = _round_up(B, tb), _round_up(N, tn)
    label2d = label.reshape(B, 1).astype(jnp.int32)
    if Bp != B:
        x = jnp.pad(x, ((0, Bp - B), (0, 0)))
        label2d = jnp.pad(label2d, ((0, Bp - B), (0, 0)))
    if Np != N:
        weight = jnp.pad(weight, ((0, Np - N), (0, 0)))

    kernel = functools.partial(
        _arcmargin_kernel,
        s=float(s), cos_m=float(math.cos(m)), sin_m=float(math.sin(m)), tn=tn)

    cost = pl.CostEstimate(
        flops=2 * Bp * Np * D,
        transcendentals=Bp * (Np // tn) + Bp + Np,
        bytes_accessed=(Bp * D * jnp.dtype(x.dtype).itemsize
                        + Np * D * jnp.dtype(weight.dtype).itemsize
                        + Bp * 4
                        + Bp * Np * jnp.dtype(out_dtype).itemsize))

    out = pl.pallas_call(
        kernel,
        out_shape=jax.ShapeDtypeStruct((Bp, Np), out_dtype),
        grid_spec=pltpu.PrefetchScalarGridSpec(
            num_scalar_prefetch=0,
            grid=(Bp // tb, Np // tn),
            in_specs=[
                pl.BlockSpec((tb, D), lambda i, j: (i, 0)),   # x batch tile
                pl.BlockSpec((tn, D), lambda i, j: (j, 0)),   # weight class tile
                pl.BlockSpec((tb, 1), lambda i, j: (i, 0)),   # labels
            ],
            out_specs=pl.BlockSpec((tb, tn), lambda i, j: (i, j)),
        ),
        compiler_params=pltpu.CompilerParams(
            dimension_semantics=("parallel", "parallel")),
        cost_estimate=cost,
    )(x, weight, label2d)

    return out[:B, :N]


def _xavier_uniform(key, out_features, in_features):
    bound = math.sqrt(6.0 / (in_features + out_features))
    return jax.random.uniform(
        key, (out_features, in_features), jnp.float32, -bound, bound)


if __name__ == "__main__":
    B = 16
    in_features = 32
    out_features = 1024   # > one class tile, exercises the j*TN offset

    key = jax.random.PRNGKey(0)
    k_x, k_w, k_l = jax.random.split(key, 3)

    x = jax.random.normal(k_x, (B, in_features), jnp.float32)
    weight = _xavier_uniform(k_w, out_features, in_features)
    label = jax.random.randint(k_l, (B,), 0, out_features, jnp.int32)

    # tb=8, tn=512 -> a (2, 2) grid so both batch and class tiling are tested.
    out = arc_margin_product(x, weight, label, s=64.0, m=0.5, tb=8, tn=512)
    jax.block_until_ready(out)

    # Pure-JAX reference matching the PyTorch forward.
    xn = x / jnp.maximum(jnp.linalg.norm(x, axis=1, keepdims=True), 1e-12)
    wn = weight / jnp.maximum(jnp.linalg.norm(weight, axis=1, keepdims=True), 1e-12)
    cos = jnp.clip(xn @ wn.T, -1.0 + 1e-05, 1.0 - 1e-05)
    phi = cos * math.cos(0.5) - jnp.sqrt(1.0 - cos ** 2 + 1e-07) * math.sin(0.5)
    oh = jax.nn.one_hot(label, out_features, dtype=jnp.float32)
    ref = (oh * phi + (1.0 - oh) * cos) * 64.0

    assert out.shape == ref.shape
    assert jnp.allclose(out, ref, atol=2e-3, rtol=1e-3), "mismatch vs reference"

    print("KERNEL_OK")
</pallas_src>

<mosaic_0001>
module attributes {stable_mosaic.version = 11 : i64} {
  func.func @_arcmargin_kernel(%arg0: i32, %arg1: i32, %arg2: memref<8x32xf32, #tpu.memory_space<vmem>>, %arg3: memref<512x32xf32, #tpu.memory_space<vmem>>, %arg4: memref<8x1xi32, #tpu.memory_space<vmem>>, %arg5: memref<8x512xf32, #tpu.memory_space<vmem>>) attributes {dimension_semantics = [#tpu.dimension_semantics<parallel>, #tpu.dimension_semantics<parallel>], iteration_bounds = array<i64: 2, 2>, scalar_prefetch = 0 : i64, scratch_operands = 0 : i64, tpu.core_type = #tpu.core_type<tc>, window_params = [{transform_indices = @transform_0, window_bounds = array<i64: 8, 32>}, {transform_indices = @transform_1, window_bounds = array<i64: 512, 32>}, {transform_indices = @transform_2, window_bounds = array<i64: 8, 1>}, {transform_indices = @transform_3, window_bounds = array<i64: 8, 512>}]} {
    %c0 = arith.constant 0 : index
    %c0_0 = arith.constant 0 : index
    %0 = vector.load %arg2[%c0, %c0_0] : memref<8x32xf32, #tpu.memory_space<vmem>>, vector<8x32xf32>
    %c0_1 = arith.constant 0 : index
    %c0_2 = arith.constant 0 : index
    %1 = vector.load %arg3[%c0_1, %c0_2] : memref<512x32xf32, #tpu.memory_space<vmem>>, vector<512x32xf32>
    %c0_3 = arith.constant 0 : index
    %c0_4 = arith.constant 0 : index
    %2 = vector.load %arg4[%c0_3, %c0_4] : memref<8x1xi32, #tpu.memory_space<vmem>>, vector<8x1xi32>
    %3 = arith.mulf %0, %0 : vector<8x32xf32>
    %cst = arith.constant dense<0.000000e+00> : vector<8xf32>
    %4 = vector.multi_reduction <add>, %3, %cst [1] : vector<8x32xf32> to vector<8xf32>
    %5 = vector.shape_cast %4 : vector<8xf32> to vector<8x1xf32>
    %6 = math.rsqrt %5 : vector<8x1xf32>
    %cst_5 = arith.constant 9.99999995E+11 : f32
    %7 = vector.broadcast %cst_5 : f32 to vector<8x1xf32>
    %8 = arith.minimumf %6, %7 : vector<8x1xf32>
    %9 = arith.mulf %1, %1 : vector<512x32xf32>
    %cst_6 = arith.constant dense<0.000000e+00> : vector<512xf32>
    %10 = vector.multi_reduction <add>, %9, %cst_6 [1] : vector<512x32xf32> to vector<512xf32>
    %11 = vector.shape_cast %10 : vector<512xf32> to vector<512x1xf32>
    %12 = math.rsqrt %11 : vector<512x1xf32>
    %cst_7 = arith.constant 9.99999995E+11 : f32
    %13 = vector.broadcast %cst_7 : f32 to vector<512x1xf32>
    %14 = arith.minimumf %12, %13 : vector<512x1xf32>
    %15 = vector.broadcast %8 : vector<8x1xf32> to vector<8x32xf32>
    %16 = arith.mulf %0, %15 : vector<8x32xf32>
    %17 = vector.broadcast %14 : vector<512x1xf32> to vector<512x32xf32>
    %18 = arith.mulf %1, %17 : vector<512x32xf32>
    %cst_8 = arith.constant dense<0.000000e+00> : vector<8x512xf32>
    %19 = tpu.matmul %16, %18, %cst_8 {dimension_numbers = #tpu.dot_dimension_numbers<[1], [1], [0], [0], [0, 0, 1, 0], [], []>} : vector<8x32xf32>, vector<512x32xf32>, vector<8x512xf32> -> vector<8x512xf32>
    %cst_9 = arith.constant -0.999989986 : f32
    %cst_10 = arith.constant 0.999989986 : f32
    %20 = vector.broadcast %cst_9 : f32 to vector<8x512xf32>
    %21 = arith.maximumf %20, %19 : vector<8x512xf32>
    %22 = vector.broadcast %cst_10 : f32 to vector<8x512xf32>
    %23 = arith.minimumf %22, %21 : vector<8x512xf32>
    %24 = tpu.iota {dimensions = array<i32: 1>} : vector<8x512xi32>
    %c512_i32 = arith.constant 512 : i32
    %25 = arith.muli %arg1, %c512_i32 : i32
    %26 = vector.broadcast %25 : i32 to vector<8x1xi32>
    %27 = arith.subi %2, %26 : vector<8x1xi32>
    %28 = vector.broadcast %27 : vector<8x1xi32> to vector<8x512xi32>
    %29 = arith.cmpi eq, %24, %28 : vector<8x512xi32>
    %cst_11 = arith.constant 0.000000e+00 : f32
    %30 = vector.broadcast %cst_11 : f32 to vector<8x512xf32>
    %31 = arith.select %29, %23, %30 : vector<8x512xi1>, vector<8x512xf32>
    %cst_12 = arith.constant dense<0.000000e+00> : vector<8xf32>
    %32 = vector.multi_reduction <add>, %31, %cst_12 [1] : vector<8x512xf32> to vector<8xf32>
    %33 = vector.shape_cast %32 : vector<8xf32> to vector<8x1xf32>
    %cst_13 = arith.constant 0.87758255 : f32
    %34 = vector.broadcast %cst_13 : f32 to vector<8x1xf32>
    %35 = arith.mulf %33, %34 : vector<8x1xf32>
    %36 = arith.mulf %33, %33 : vector<8x1xf32>
    %cst_14 = arith.constant 1.000000e+00 : f32
    %37 = vector.broadcast %cst_14 : f32 to vector<8x1xf32>
    %38 = arith.subf %37, %36 : vector<8x1xf32>
    %cst_15 = arith.constant 1.000000e-07 : f32
    %39 = vector.broadcast %cst_15 : f32 to vector<8x1xf32>
    %40 = arith.addf %38, %39 : vector<8x1xf32>
    %41 = math.sqrt %40 : vector<8x1xf32>
    %cst_16 = arith.constant 0.47942555 : f32
    %42 = vector.broadcast %cst_16 : f32 to vector<8x1xf32>
    %43 = arith.mulf %41, %42 : vector<8x1xf32>
    %44 = arith.subf %35, %43 : vector<8x1xf32>
    %45 = vector.shape_cast %44 : vector<8x1xf32> to vector<8x1xf32>
    %46 = vector.broadcast %45 : vector<8x1xf32> to vector<8x512xf32>
    %47 = arith.select %29, %46, %23 : vector<8x512xi1>, vector<8x512xf32>
    %cst_17 = arith.constant 6.400000e+01 : f32
    %48 = vector.broadcast %cst_17 : f32 to vector<8x512xf32>
    %49 = arith.mulf %47, %48 : vector<8x512xf32>
    %c0_18 = arith.constant 0 : index
    %c0_19 = arith.constant 0 : index
    %50 = vector.load %arg5[%c0_18, %c0_19] : memref<8x512xf32, #tpu.memory_space<vmem>>, vector<8x512xf32>
    tpu.vector_store %arg5[%c0_18, %c0_19], %49 {strides = array<i32>} : memref<8x512xf32, #tpu.memory_space<vmem>>, vector<8x512xf32>,
    return
  }
  func.func @transform_0(%arg0: i32, %arg1: i32) -> (i32, i32) {
    %c0_i32 = arith.constant 0 : i32
    %c0_i32_0 = arith.constant 0 : i32
    return %arg0, %c0_i32 : i32, i32
  }
  func.func @transform_1(%arg0: i32, %arg1: i32) -> (i32, i32) {
    %c0_i32 = arith.constant 0 : i32
    %c0_i32_0 = arith.constant 0 : i32
    return %arg1, %c0_i32 : i32, i32
  }
  func.func @transform_2(%arg0: i32, %arg1: i32) -> (i32, i32) {
    %c0_i32 = arith.constant 0 : i32
    %c0_i32_0 = arith.constant 0 : i32
    return %arg0, %c0_i32 : i32, i32
  }
  func.func @transform_3(%arg0: i32, %arg1: i32) -> (i32, i32) {
    %c0_i32 = arith.constant 0 : i32
    return %arg0, %arg1 : i32, i32
  }
}

</mosaic_0001>

<llo_original>
// kernel: tpu_custom_call.1
$region0: #{tpu_custom_call.1}
  #allocation0 [shape = 'u32[]', space=smem, size = 0x4, offset = 0x4, fixed_abs, tag = 'smem constant byte address 0x4 - core index']
  #allocation1 [shape = 'u32[144,128]{1,0:T(1,128)}', space=vmem, size = 0x12000, scoped, tag = 'internal scratch']
  %s0 = inlined_call_operand.vmem [shape: f32[16,32], index: 0, kind: input, shape index: {}]
  %s1 = inlined_call_operand.vmem [shape: f32[1024,32], index: 1, kind: input, shape index: {}]
  %s2 = inlined_call_operand.vmem [shape: s32[16,1], index: 2, kind: input, shape index: {}]
  %s3 = inlined_call_operand.hbm [shape: f32[16,1024], index: 3, kind: output, shape index: {}]
  %s4 = sld [smem:[#allocation0]]
  $region45: #{tpu_custom_call.1} parent=0
    _
  %s6 = ssub.s32 1, %s4
  %s7 = scalar_select 0, %s6, %s4
  $region1: #{tpu_custom_call.1} parent=0
    #allocation2 [shape = 'u8[32768]{0}', space=vmem, size = 0x8000, scoped, tag = 'output window, operand 0']
    #allocation3 [shape = 's32[2]{0}', space=sflag, size = 0x8, scoped, tag = 'scoped memory for tpu_custom_call.1']
    %8 = vsyncpa [#allocation3], 0
    %s9 = scalar_lea.sflag [#allocation3], 1
    %10 = vsyncpa %s9, 0
    loop: start=0, step=1, limit=6
    $region2: #{tpu_custom_call.1} parent=1 // loop_pre_header
      _
    $region3: #{tpu_custom_call.1} parent=1 // loop_header
      %s12 = sphi 0, %s16
      %p13 = scmp.ge.s32.totalorder %s12, 6
      %s19 = sphi 0, %s31
      %s20 = sphi 0, %s27
      %s21 = sphi 0, %s19
      %s22 = sphi 0, %s20
      %s23 = sphi 0, %s21
      %s24 = sphi 0, %s22
      %s34 = sphi 0, %s36
      %s37 = sphi 0, %s34
      %s38 = sphi 0, %s37
      %s54 = sphi 0, %s38
      %s60 = sphi 0, %s62
      %s63 = sphi 0, %s60
      %s64 = sphi 0, %s63
      %s80 = sphi 0, %s64
      %s86 = sphi 0, %s88
      %s89 = sphi 0, %s86
      %s90 = sphi 0, %s89
      %s106 = sphi 0, %s90
      %s114 = sphi 0, %s116
      %s117 = sphi 0, %s114
      %s118 = sphi 0, %s117
      %s134 = sphi 0, %s118
    $region4: #{tpu_custom_call.1} parent=1 // loop_header_branch
      %15 = sbr.rel (%p13) target = $region8
    $region5: #{tpu_custom_call.1} parent=1 // loop_body
      %s17 = ssub.s32 %s12, 1
      %s18 = ssub.s32 %s12, 2
      %s25 = sadd.s32 1, %s20
      %p26 = scmp.ge.s32.totalorder %s25, 2
      %s27 = scalar_select %p26, 0, %s25
      %s28 = sadd.s32 1, %s19
      %s29 = scalar_select %p26, %s28, %s19
      %p30 = scmp.ge.s32.totalorder %s29, 2
      %s31 = scalar_select %p30, 0, %s29
      %s32 = ssub.s32 %s19, %s31
      %p33 = scmp.eq.s32.totalorder %s32, 0
      %s35 = sadd.s32 %s34, 1
      %s36 = scalar_select %p33, %s34, %s35
      %p39 = pneg %p33
      %p40 = scmp.eq.s32.totalorder %s12, 3
      %p41 = por %p39, %p40
      %p42 = scmp.ne.s32.totalorder %s34, %s37
      %p43 = scmp.eq.s32.totalorder %s12, 0
      %p44 = por %p42, %p43
      %p45 = scmp.ne.s32.totalorder %s34, %s37
      %p46 = scmp.eq.s32.totalorder %s17, 3
      %p47 = por %p45, %p46
      %p48 = scmp.ne.s32.totalorder %s37, %s38
      %p49 = scmp.eq.s32.totalorder %s17, 0
      %p50 = por %p48, %p49
      %p51 = scmp.ne.s32.totalorder %s37, %s38
      %p52 = scmp.eq.s32.totalorder %s18, 3
      %p53 = por %p51, %p52
      %p55 = scmp.ne.s32.totalorder %s38, %s54
      %p56 = scmp.eq.s32.totalorder %s18, 0
      %p57 = por %p55, %p56
      %s58 = ssub.s32 %s20, %s27
      %p59 = scmp.eq.s32.totalorder %s58, 0
      %s61 = sadd.s32 %s60, 1
      %s62 = scalar_select %p59, %s60, %s61
      %p65 = pneg %p59
      %p66 = scmp.eq.s32.totalorder %s12, 3
      %p67 = por %p65, %p66
      %p68 = scmp.ne.s32.totalorder %s60, %s63
      %p69 = scmp.eq.s32.totalorder %s12, 0
      %p70 = por %p68, %p69
      %p71 = scmp.ne.s32.totalorder %s60, %s63
      %p72 = scmp.eq.s32.totalorder %s17, 3
      %p73 = por %p71, %p72
      %p74 = scmp.ne.s32.totalorder %s63, %s64
      %p75 = scmp.eq.s32.totalorder %s17, 0
      %p76 = por %p74, %p75
      %p77 = scmp.ne.s32.totalorder %s63, %s64
      %p78 = scmp.eq.s32.totalorder %s18, 3
      %p79 = por %p77, %p78
      %p81 = scmp.ne.s32.totalorder %s64, %s80
      %p82 = scmp.eq.s32.totalorder %s18, 0
      %p83 = por %p81, %p82
      %s84 = ssub.s32 %s19, %s31
      %p85 = scmp.eq.s32.totalorder %s84, 0
      %s87 = sadd.s32 %s86, 1
      %s88 = scalar_select %p85, %s86, %s87
      %p91 = pneg %p85
      %p92 = scmp.eq.s32.totalorder %s12, 3
      %p93 = por %p91, %p92
      %p94 = scmp.ne.s32.totalorder %s86, %s89
      %p95 = scmp.eq.s32.totalorder %s12, 0
      %p96 = por %p94, %p95
      %p97 = scmp.ne.s32.totalorder %s86, %s89
      %p98 = scmp.eq.s32.totalorder %s17, 3
      %p99 = por %p97, %p98
      %p100 = scmp.ne.s32.totalorder %s89, %s90
      %p101 = scmp.eq.s32.totalorder %s17, 0
      %p102 = por %p100, %p101
      %p103 = scmp.ne.s32.totalorder %s89, %s90
      %p104 = scmp.eq.s32.totalorder %s18, 3
      %p105 = por %p103, %p104
      %p107 = scmp.ne.s32.totalorder %s90, %s106
      %p108 = scmp.eq.s32.totalorder %s18, 0
      %p109 = por %p107, %p108
      %s110 = ssub.s32 %s19, %s31
      %s111 = ssub.s32 %s20, %s27
      %s112 = sor.u32 %s110, %s111
      %p113 = scmp.eq.s32.totalorder %s112, 0
      %s115 = sadd.s32 %s114, 1
      %s116 = scalar_select %p113, %s114, %s115
      %p119 = pneg %p113
      %p120 = scmp.eq.s32.totalorder %s12, 3
      %p121 = por %p119, %p120
      %p122 = scmp.ne.s32.totalorder %s114, %s117
      %p123 = scmp.eq.s32.totalorder %s12, 0
      %p124 = por %p122, %p123
      %p125 = scmp.ne.s32.totalorder %s114, %s117
      %p126 = scmp.eq.s32.totalorder %s17, 3
      %p127 = por %p125, %p126
      %p128 = scmp.ne.s32.totalorder %s117, %s118
      %p129 = scmp.eq.s32.totalorder %s17, 0
      %p130 = por %p128, %p129
      %p131 = scmp.ne.s32.totalorder %s117, %s118
      %p132 = scmp.eq.s32.totalorder %s18, 3
      %p133 = por %p131, %p132
      %p135 = scmp.ne.s32.totalorder %s118, %s134
      %p136 = scmp.eq.s32.totalorder %s18, 0
      %p137 = por %p135, %p136
      %p138 = scmp.le.s32.totalorder 1, %s12
      %p139 = scmp.lt.s32.totalorder %s12, 5
      %p140 = pnand %p138, %p139
      %p141 = pneg %p140
      // Predicated region
      $region9: #{tpu_custom_call.1} parent=5 // pred_check
        _
      $region10: #{tpu_custom_call.1} parent=5 // pred_check_branch
        %143 = sbr.rel (%p140) target = $region12
      $region11: #{tpu_custom_call.1} parent=5 // pred_region
        %s144 = ssub.s32 %s12, 1
      $region12: #{tpu_custom_call.1} parent=5 // pred_fallthru
        _
      %p145 = scmp.lt.s32.totalorder %s12, 4
      // Predicated region
      $region13: #{tpu_custom_call.1} parent=5 // pred_check
        %p146 = pneg %p145
      $region14: #{tpu_custom_call.1} parent=5 // pred_check_branch
        %148 = sbr.rel (%p146) target = $region16
      $region15: #{tpu_custom_call.1} parent=5 // pred_region
        // Predicated region
        $region17: #{tpu_custom_call.1} parent=15 // pred_check
          %p149 = pneg %p44
        $region18: #{tpu_custom_call.1} parent=15 // pred_check_branch
          %151 = sbr.rel (%p149) target = $region20
        $region19: #{tpu_custom_call.1} parent=15 // pred_region
          %p152 = scmp.lt.s32.totalorder %s19, 1
          %s153 = scalar_select %p152, %s19, 1
          %s154 = smul.addr %s153, 8
          %s155 = scalar_lea.vmem %s0, %s154
        $region20: #{tpu_custom_call.1} parent=15 // pred_fallthru
          _
        // Predicated region
        $region21: #{tpu_custom_call.1} parent=15 // pred_check
          %p156 = pneg %p70
        $region22: #{tpu_custom_call.1} parent=15 // pred_check_branch
          %158 = sbr.rel (%p156) target = $region24
        $region23: #{tpu_custom_call.1} parent=15 // pred_region
          %s159 = smul.u32 64, %s20
          %p160 = scmp.lt.s32.totalorder %s159, 127
          %s161 = scalar_select %p160, %s159, 127
          %s162 = smul.addr %s161, 8
          %s163 = scalar_lea.vmem %s1, %s162
          %s164 = smul.u32 64, %s20
        $region24: #{tpu_custom_call.1} parent=15 // pred_fallthru
          _
        // Predicated region
        $region25: #{tpu_custom_call.1} parent=15 // pred_check
          %p165 = pneg %p96
        $region26: #{tpu_custom_call.1} parent=15 // pred_check_branch
          %167 = sbr.rel (%p165) target = $region28
        $region27: #{tpu_custom_call.1} parent=15 // pred_region
          %p168 = scmp.lt.s32.totalorder %s19, 1
          %s169 = scalar_select %p168, %s19, 1
          %s170 = smul.addr %s169, 8
          %s171 = scalar_lea.vmem %s2, %s170
        $region28: #{tpu_custom_call.1} parent=15 // pred_fallthru
          _
      $region16: #{tpu_custom_call.1} parent=5 // pred_fallthru
        _
      %p172 = scmp.le.s32.totalorder 1, %s12
      %p173 = scmp.lt.s32.totalorder %s12, 5
      %p174 = pnand %p172, %p173
      %p175 = pneg %p174
      // Predicated region
      $region29: #{tpu_custom_call.1} parent=5 // pred_check
        _
      $region30: #{tpu_custom_call.1} parent=5 // pred_check_branch
        %177 = sbr.rel (%p174) target = $region32
      $region31: #{tpu_custom_call.1} parent=5 // pred_region
        %s178 = ssub.s32 %s12, 1
        %p179 = scmp.lt.s32.totalorder %s21, 1
        %s180 = scalar_select %p179, %s21, 1
        %s181 = smul.addr %s180, 8
        %s182 = scalar_lea.vmem %s0, %s181
        %p183 = pneg %p50
        %p184 = pneg %p47
        %s185 = smul.u32 64, %s22
        %p186 = scmp.lt.s32.totalorder %s185, 127
        %s187 = scalar_select %p186, %s185, 127
        %s188 = smul.addr %s187, 8
        %s189 = scalar_lea.vmem %s1, %s188
        %p190 = pneg %p76
        %p191 = pneg %p73
        %p192 = scmp.lt.s32.totalorder %s21, 1
        %s193 = scalar_select %p192, %s21, 1
        %s194 = smul.addr %s193, 8
        %s195 = scalar_lea.vmem %s2, %s194
        %p196 = pneg %p102
        %p197 = pneg %p99
        %p198 = pneg %p130
        %p199 = pneg %p127
        %s200 = sand.u32 %s117, 1
        %s201 = scalar_lea.sflag [#allocation3], %s200
        %s202 = sand.u32 %s117, 1
        %s203 = smul.addr %s202, 32
        %s204 = scalar_lea.vmem [#allocation2], %s203
        %p205 = scmp.lt.s32.totalorder %s21, 1
        %s206 = scalar_select %p205, %s21, 1
        %s207 = smul.addr %s206, 8
        %s208 = scalar_lea.vmem %s0, %s207
        %s209 = smul.u32 64, %s22
        %p210 = scmp.lt.s32.totalorder %s209, 127
        %s211 = scalar_select %p210, %s209, 127
        %s212 = smul.addr %s211, 8
        %s213 = scalar_lea.vmem %s1, %s212
        %s214 = smul.u32 64, %s22
        %p215 = scmp.lt.s32.totalorder %s21, 1
        %s216 = scalar_select %p215, %s21, 1
        %s217 = smul.addr %s216, 8
        %s218 = scalar_lea.vmem %s2, %s217
        %s219 = smul.u32 4, %s22
        %v220 = vld [vmem:[%s208] sm:$0xff]
        %v221 = vld [vmem:[%s213] sm:$0xff]
        %v222 = vld [vmem:[%s213 + $0x8] sm:$0xff]
        %v223 = vld [vmem:[%s213 + $0x10] sm:$0xff]
        %v224 = vld [vmem:[%s213 + $0x18] sm:$0xff]
        %v225 = vld [vmem:[%s213 + $0x20] sm:$0xff]
        %v226 = vld [vmem:[%s213 + $0x28] sm:$0xff]
        %v227 = vld [vmem:[%s213 + $0x30] sm:$0xff]
        %v228 = vld [vmem:[%s213 + $0x38] sm:$0xff]
        %v229 = vld [vmem:[%s213 + $0x40] sm:$0xff]
        %v230 = vld [vmem:[%s213 + $0x48] sm:$0xff]
        %v231 = vld [vmem:[%s213 + $0x50] sm:$0xff]
        %v232 = vld [vmem:[%s213 + $0x58] sm:$0xff]
        %v233 = vld [vmem:[%s213 + $0x60] sm:$0xff]
        %v234 = vld [vmem:[%s213 + $0x68] sm:$0xff]
        %v235 = vld [vmem:[%s213 + $0x70] sm:$0xff]
        %v236 = vld [vmem:[%s213 + $0x78] sm:$0xff]
        %v237 = vld [vmem:[%s213 + $0x80] sm:$0xff]
        %v238 = vld [vmem:[%s213 + $0x88] sm:$0xff]
        %v239 = vld [vmem:[%s213 + $0x90] sm:$0xff]
        %v240 = vld [vmem:[%s213 + $0x98] sm:$0xff]
        %v241 = vld [vmem:[%s213 + $0xa0] sm:$0xff]
        %v242 = vld [vmem:[%s213 + $0xa8] sm:$0xff]
        %v243 = vld [vmem:[%s213 + $0xb0] sm:$0xff]
        %v244 = vld [vmem:[%s213 + $0xb8] sm:$0xff]
        %v245 = vld [vmem:[%s213 + $0xc0] sm:$0xff]
        %v246 = vld [vmem:[%s213 + $0xc8] sm:$0xff]
        %v247 = vld [vmem:[%s213 + $0xd0] sm:$0xff]
        %v248 = vld [vmem:[%s213 + $0xd8] sm:$0xff]
        %v249 = vld [vmem:[%s213 + $0xe0] sm:$0xff]
        %v250 = vld [vmem:[%s213 + $0xe8] sm:$0xff]
        %v251 = vld [vmem:[%s213 + $0xf0] sm:$0xff]
        %v252 = vld [vmem:[%s213 + $0xf8] sm:$0xff]
        %v253 = vld [vmem:[%s213 + $0x100] sm:$0xff]
        %v254 = vld [vmem:[%s213 + $0x108] sm:$0xff]
        %v255 = vld [vmem:[%s213 + $0x110] sm:$0xff]
        %v256 = vld [vmem:[%s213 + $0x118] sm:$0xff]
        %v257 = vld [vmem:[%s213 + $0x120] sm:$0xff]
        %v258 = vld [vmem:[%s213 + $0x128] sm:$0xff]
        %v259 = vld [vmem:[%s213 + $0x130] sm:$0xff]
        %v260 = vld [vmem:[%s213 + $0x138] sm:$0xff]
        %v261 = vld [vmem:[%s213 + $0x140] sm:$0xff]
        %v262 = vld [vmem:[%s213 + $0x148] sm:$0xff]
        %v263 = vld [vmem:[%s213 + $0x150] sm:$0xff]
        %v264 = vld [vmem:[%s213 + $0x158] sm:$0xff]
        %v265 = vld [vmem:[%s213 + $0x160] sm:$0xff]
        %v266 = vld [vmem:[%s213 + $0x168] sm:$0xff]
        %v267 = vld [vmem:[%s213 + $0x170] sm:$0xff]
        %v268 = vld [vmem:[%s213 + $0x178] sm:$0xff]
        %v269 = vld [vmem:[%s213 + $0x180] sm:$0xff]
        %v270 = vld [vmem:[%s213 + $0x188] sm:$0xff]
        %v271 = vld [vmem:[%s213 + $0x190] sm:$0xff]
        %v272 = vld [vmem:[%s213 + $0x198] sm:$0xff]
        %v273 = vld [vmem:[%s213 + $0x1a0] sm:$0xff]
        %v274 = vld [vmem:[%s213 + $0x1a8] sm:$0xff]
        %v275 = vld [vmem:[%s213 + $0x1b0] sm:$0xff]
        %v276 = vld [vmem:[%s213 + $0x1b8] sm:$0xff]
        %v277 = vld [vmem:[%s213 + $0x1c0] sm:$0xff]
        %v278 = vld [vmem:[%s213 + $0x1c8] sm:$0xff]
        %v279 = vld [vmem:[%s213 + $0x1d0] sm:$0xff]
        %v280 = vld [vmem:[%s213 + $0x1d8] sm:$0xff]
        %v281 = vld [vmem:[%s213 + $0x1e0] sm:$0xff]
        %v282 = vld [vmem:[%s213 + $0x1e8] sm:$0xff]
        %v283 = vld [vmem:[%s213 + $0x1f0] sm:$0xff]
        %v284 = vld [vmem:[%s213 + $0x1f8] sm:$0xff]
        %v285 = vld [vmem:[%s218] sm:$0xff]
        %v286 = vmul.f32 %v220, %v220
        %vm287 = vcmask 261120
        %v288 = vsel %vm287, %v286, 0.0
        %289 = vadd.xlane.f32.xlu0 %v288
        %v290 = vpop.xlane.xlu0 %289
        %v291 = vrsqrt.pop %v290
        %v292 = vmin.f32 %v291, 1e+12
        %v293 = vmul.f32 %v221, %v221
        %v294 = vmul.f32 %v222, %v222
        %v295 = vmul.f32 %v223, %v223
        %v296 = vmul.f32 %v224, %v224
        %v297 = vmul.f32 %v225, %v225
        %v298 = vmul.f32 %v226, %v226
        %v299 = vmul.f32 %v227, %v227
        %v300 = vmul.f32 %v228, %v228
        %v301 = vmul.f32 %v229, %v229
        %v302 = vmul.f32 %v230, %v230
        %v303 = vmul.f32 %v231, %v231
        %v304 = vmul.f32 %v232, %v232
        %v305 = vmul.f32 %v233, %v233
        %v306 = vmul.f32 %v234, %v234
        %v307 = vmul.f32 %v235, %v235
        %v308 = vmul.f32 %v236, %v236
        %v309 = vmul.f32 %v237, %v237
        %v310 = vmul.f32 %v238, %v238
        %v311 = vmul.f32 %v239, %v239
        %v312 = vmul.f32 %v240, %v240
        %v313 = vmul.f32 %v241, %v241
        %v314 = vmul.f32 %v242, %v242
        %v315 = vmul.f32 %v243, %v243
        %v316 = vmul.f32 %v244, %v244
        %v317 = vmul.f32 %v245, %v245
        %v318 = vmul.f32 %v246, %v246
        %v319 = vmul.f32 %v247, %v247
        %v320 = vmul.f32 %v248, %v248
        %v321 = vmul.f32 %v249, %v249
        %v322 = vmul.f32 %v250, %v250
        %v323 = vmul.f32 %v251, %v251
        %v324 = vmul.f32 %v252, %v252
        %v325 = vmul.f32 %v253, %v253
        %v326 = vmul.f32 %v254, %v254
        %v327 = vmul.f32 %v255, %v255
        %v328 = vmul.f32 %v256, %v256
        %v329 = vmul.f32 %v257, %v257
        %v330 = vmul.f32 %v258, %v258
        %v331 = vmul.f32 %v259, %v259
        %v332 = vmul.f32 %v260, %v260
        %v333 = vmul.f32 %v261, %v261
        %v334 = vmul.f32 %v262, %v262
        %v335 = vmul.f32 %v263, %v263
        %v336 = vmul.f32 %v264, %v264
        %v337 = vmul.f32 %v265, %v265
        %v338 = vmul.f32 %v266, %v266
        %v339 = vmul.f32 %v267, %v267
        %v340 = vmul.f32 %v268, %v268
        %v341 = vmul.f32 %v269, %v269
        %v342 = vmul.f32 %v270, %v270
        %v343 = vmul.f32 %v271, %v271
        %v344 = vmul.f32 %v272, %v272
        %v345 = vmul.f32 %v273, %v273
        %v346 = vmul.f32 %v274, %v274
        %v347 = vmul.f32 %v275, %v275
        %v348 = vmul.f32 %v276, %v276
        %v349 = vmul.f32 %v277, %v277
        %v350 = vmul.f32 %v278, %v278
        %v351 = vmul.f32 %v279, %v279
        %v352 = vmul.f32 %v280, %v280
        %v353 = vmul.f32 %v281, %v281
        %v354 = vmul.f32 %v282, %v282
        %v355 = vmul.f32 %v283, %v283
        %v356 = vmul.f32 %v284, %v284
        %v357 = vsel %vm287, %v293, 0.0
        %358 = vadd.xlane.f32.xlu0 %v357
        %v359 = vpop.xlane.xlu0 %358
        %v360 = vsel %vm287, %v294, 0.0
        %361 = vadd.xlane.f32.xlu0 %v360
        %v362 = vpop.xlane.xlu0 %361
        %v363 = vsel %vm287, %v295, 0.0
        %364 = vadd.xlane.f32.xlu0 %v363
        %v365 = vpop.xlane.xlu0 %364
        %v366 = vsel %vm287, %v296, 0.0
        %367 = vadd.xlane.f32.xlu0 %v366
        %v368 = vpop.xlane.xlu0 %367
        %v369 = vsel %vm287, %v297, 0.0
        %370 = vadd.xlane.f32.xlu0 %v369
        %v371 = vpop.xlane.xlu0 %370
        %v372 = vsel %vm287, %v298, 0.0
        %373 = vadd.xlane.f32.xlu0 %v372
        %v374 = vpop.xlane.xlu0 %373
        %v375 = vsel %vm287, %v299, 0.0
        %376 = vadd.xlane.f32.xlu0 %v375
        %v377 = vpop.xlane.xlu0 %376
        %v378 = vsel %vm287, %v300, 0.0
        %379 = vadd.xlane.f32.xlu0 %v378
        %v380 = vpop.xlane.xlu0 %379
        %v381 = vsel %vm287, %v301, 0.0
        %382 = vadd.xlane.f32.xlu0 %v381
        %v383 = vpop.xlane.xlu0 %382
        %v384 = vsel %vm287, %v302, 0.0
        %385 = vadd.xlane.f32.xlu0 %v384
        %v386 = vpop.xlane.xlu0 %385
        %v387 = vsel %vm287, %v303, 0.0
        %388 = vadd.xlane.f32.xlu0 %v387
        %v389 = vpop.xlane.xlu0 %388
        %v390 = vsel %vm287, %v304, 0.0
        %391 = vadd.xlane.f32.xlu0 %v390
        %v392 = vpop.xlane.xlu0 %391
        %v393 = vsel %vm287, %v305, 0.0
        %394 = vadd.xlane.f32.xlu0 %v393
        %v395 = vpop.xlane.xlu0 %394
        %v396 = vsel %vm287, %v306, 0.0
        %397 = vadd.xlane.f32.xlu0 %v396
        %v398 = vpop.xlane.xlu0 %397
        %v399 = vsel %vm287, %v307, 0.0
        %400 = vadd.xlane.f32.xlu0 %v399
        %v401 = vpop.xlane.xlu0 %400
        %v402 = vsel %vm287, %v308, 0.0
        %403 = vadd.xlane.f32.xlu0 %v402
        %v404 = vpop.xlane.xlu0 %403
        %v405 = vsel %vm287, %v309, 0.0
        %406 = vadd.xlane.f32.xlu0 %v405
        %v407 = vpop.xlane.xlu0 %406
        %v408 = vsel %vm287, %v310, 0.0
        %409 = vadd.xlane.f32.xlu0 %v408
        %v410 = vpop.xlane.xlu0 %409
        %v411 = vsel %vm287, %v311, 0.0
        %412 = vadd.xlane.f32.xlu0 %v411
        %v413 = vpop.xlane.xlu0 %412
        %v414 = vsel %vm287, %v312, 0.0
        %415 = vadd.xlane.f32.xlu0 %v414
        %v416 = vpop.xlane.xlu0 %415
        %v417 = vsel %vm287, %v313, 0.0
        %418 = vadd.xlane.f32.xlu0 %v417
        %v419 = vpop.xlane.xlu0 %418
        %v420 = vsel %vm287, %v314, 0.0
        %421 = vadd.xlane.f32.xlu0 %v420
        %v422 = vpop.xlane.xlu0 %421
        %v423 = vsel %vm287, %v315, 0.0
        %424 = vadd.xlane.f32.xlu0 %v423
        %v425 = vpop.xlane.xlu0 %424
        %v426 = vsel %vm287, %v316, 0.0
        %427 = vadd.xlane.f32.xlu0 %v426
        %v428 = vpop.xlane.xlu0 %427
        %v429 = vsel %vm287, %v317, 0.0
        %430 = vadd.xlane.f32.xlu0 %v429
        %v431 = vpop.xlane.xlu0 %430
        %v432 = vsel %vm287, %v318, 0.0
        %433 = vadd.xlane.f32.xlu0 %v432
        %v434 = vpop.xlane.xlu0 %433
        %v435 = vsel %vm287, %v319, 0.0
        %436 = vadd.xlane.f32.xlu0 %v435
        %v437 = vpop.xlane.xlu0 %436
        %v438 = vsel %vm287, %v320, 0.0
        %439 = vadd.xlane.f32.xlu0 %v438
        %v440 = vpop.xlane.xlu0 %439
        %v441 = vsel %vm287, %v321, 0.0
        %442 = vadd.xlane.f32.xlu0 %v441
        %v443 = vpop.xlane.xlu0 %442
        %v444 = vsel %vm287, %v322, 0.0
        %445 = vadd.xlane.f32.xlu0 %v444
        %v446 = vpop.xlane.xlu0 %445
        %v447 = vsel %vm287, %v323, 0.0
        %448 = vadd.xlane.f32.xlu0 %v447
        %v449 = vpop.xlane.xlu0 %448
        %v450 = vsel %vm287, %v324, 0.0
        %451 = vadd.xlane.f32.xlu0 %v450
        %v452 = vpop.xlane.xlu0 %451
        %v453 = vsel %vm287, %v325, 0.0
        %454 = vadd.xlane.f32.xlu0 %v453
        %v455 = vpop.xlane.xlu0 %454
        %v456 = vsel %vm287, %v326, 0.0
        %457 = vadd.xlane.f32.xlu0 %v456
        %v458 = vpop.xlane.xlu0 %457
        %v459 = vsel %vm287, %v327, 0.0
        %460 = vadd.xlane.f32.xlu0 %v459
        %v461 = vpop.xlane.xlu0 %460
        %v462 = vsel %vm287, %v328, 0.0
        %463 = vadd.xlane.f32.xlu0 %v462
        %v464 = vpop.xlane.xlu0 %463
        %v465 = vsel %vm287, %v329, 0.0
        %466 = vadd.xlane.f32.xlu0 %v465
        %v467 = vpop.xlane.xlu0 %466
        %v468 = vsel %vm287, %v330, 0.0
        %469 = vadd.xlane.f32.xlu0 %v468
        %v470 = vpop.xlane.xlu0 %469
        %v471 = vsel %vm287, %v331, 0.0
        %472 = vadd.xlane.f32.xlu0 %v471
        %v473 = vpop.xlane.xlu0 %472
        %v474 = vsel %vm287, %v332, 0.0
        %475 = vadd.xlane.f32.xlu0 %v474
        %v476 = vpop.xlane.xlu0 %475
        %v477 = vsel %vm287, %v333, 0.0
        %478 = vadd.xlane.f32.xlu0 %v477
        %v479 = vpop.xlane.xlu0 %478
        %v480 = vsel %vm287, %v334, 0.0
        %481 = vadd.xlane.f32.xlu0 %v480
        %v482 = vpop.xlane.xlu0 %481
        %v483 = vsel %vm287, %v335, 0.0
        %484 = vadd.xlane.f32.xlu0 %v483
        %v485 = vpop.xlane.xlu0 %484
        %v486 = vsel %vm287, %v336, 0.0
        %487 = vadd.xlane.f32.xlu0 %v486
        %v488 = vpop.xlane.xlu0 %487
        %v489 = vsel %vm287, %v337, 0.0
        %490 = vadd.xlane.f32.xlu0 %v489
        %v491 = vpop.xlane.xlu0 %490
        %v492 = vsel %vm287, %v338, 0.0
        %493 = vadd.xlane.f32.xlu0 %v492
        %v494 = vpop.xlane.xlu0 %493
        %v495 = vsel %vm287, %v339, 0.0
        %496 = vadd.xlane.f32.xlu0 %v495
        %v497 = vpop.xlane.xlu0 %496
        %v498 = vsel %vm287, %v340, 0.0
        %499 = vadd.xlane.f32.xlu0 %v498
        %v500 = vpop.xlane.xlu0 %499
        %v501 = vsel %vm287, %v341, 0.0
        %502 = vadd.xlane.f32.xlu0 %v501
        %v503 = vpop.xlane.xlu0 %502
        %v504 = vsel %vm287, %v342, 0.0
        %505 = vadd.xlane.f32.xlu0 %v504
        %v506 = vpop.xlane.xlu0 %505
        %v507 = vsel %vm287, %v343, 0.0
        %508 = vadd.xlane.f32.xlu0 %v507
        %v509 = vpop.xlane.xlu0 %508
        %v510 = vsel %vm287, %v344, 0.0
        %511 = vadd.xlane.f32.xlu0 %v510
        %v512 = vpop.xlane.xlu0 %511
        %v513 = vsel %vm287, %v345, 0.0
        %514 = vadd.xlane.f32.xlu0 %v513
        %v515 = vpop.xlane.xlu0 %514
        %v516 = vsel %vm287, %v346, 0.0
        %517 = vadd.xlane.f32.xlu0 %v516
        %v518 = vpop.xlane.xlu0 %517
        %v519 = vsel %vm287, %v347, 0.0
        %520 = vadd.xlane.f32.xlu0 %v519
        %v521 = vpop.xlane.xlu0 %520
        %v522 = vsel %vm287, %v348, 0.0
        %523 = vadd.xlane.f32.xlu0 %v522
        %v524 = vpop.xlane.xlu0 %523
        %v525 = vsel %vm287, %v349, 0.0
        %526 = vadd.xlane.f32.xlu0 %v525
        %v527 = vpop.xlane.xlu0 %526
        %v528 = vsel %vm287, %v350, 0.0
        %529 = vadd.xlane.f32.xlu0 %v528
        %v530 = vpop.xlane.xlu0 %529
        %v531 = vsel %vm287, %v351, 0.0
        %532 = vadd.xlane.f32.xlu0 %v531
        %v533 = vpop.xlane.xlu0 %532
        %v534 = vsel %vm287, %v352, 0.0
        %535 = vadd.xlane.f32.xlu0 %v534
        %v536 = vpop.xlane.xlu0 %535
        %v537 = vsel %vm287, %v353, 0.0
        %538 = vadd.xlane.f32.xlu0 %v537
        %v539 = vpop.xlane.xlu0 %538
        %v540 = vsel %vm287, %v354, 0.0
        %541 = vadd.xlane.f32.xlu0 %v540
        %v542 = vpop.xlane.xlu0 %541
        %v543 = vsel %vm287, %v355, 0.0
        %544 = vadd.xlane.f32.xlu0 %v543
        %v545 = vpop.xlane.xlu0 %544
        %v546 = vsel %vm287, %v356, 0.0
        %547 = vadd.xlane.f32.xlu0 %v546
        %v548 = vpop.xlane.xlu0 %547
        %v549 = vrsqrt.pop %v359
        %v550 = vrsqrt.pop %v362
        %v551 = vrsqrt.pop %v365
        %v552 = vrsqrt.pop %v368
        %v553 = vrsqrt.pop %v371
        %v554 = vrsqrt.pop %v374
        %v555 = vrsqrt.pop %v377
        %v556 = vrsqrt.pop %v380
        %v557 = vrsqrt.pop %v383
        %v558 = vrsqrt.pop %v386
        %v559 = vrsqrt.pop %v389
        %v560 = vrsqrt.pop %v392
        %v561 = vrsqrt.pop %v395
        %v562 = vrsqrt.pop %v398
        %v563 = vrsqrt.pop %v401
        %v564 = vrsqrt.pop %v404
        %v565 = vrsqrt.pop %v407
        %v566 = vrsqrt.pop %v410
        %v567 = vrsqrt.pop %v413
        %v568 = vrsqrt.pop %v416
        %v569 = vrsqrt.pop %v419
        %v570 = vrsqrt.pop %v422
        %v571 = vrsqrt.pop %v425
        %v572 = vrsqrt.pop %v428
        %v573 = vrsqrt.pop %v431
        %v574 = vrsqrt.pop %v434
        %v575 = vrsqrt.pop %v437
        %v576 = vrsqrt.pop %v440
        %v577 = vrsqrt.pop %v443
        %v578 = vrsqrt.pop %v446
        %v579 = vrsqrt.pop %v449
        %v580 = vrsqrt.pop %v452
        %v581 = vrsqrt.pop %v455
        %v582 = vrsqrt.pop %v458
        %v583 = vrsqrt.pop %v461
        %v584 = vrsqrt.pop %v464
        %v585 = vrsqrt.pop %v467
        %v586 = vrsqrt.pop %v470
        %v587 = vrsqrt.pop %v473
        %v588 = vrsqrt.pop %v476
        %v589 = vrsqrt.pop %v479
        %v590 = vrsqrt.pop %v482
        %v591 = vrsqrt.pop %v485
        %v592 = vrsqrt.pop %v488
        %v593 = vrsqrt.pop %v491
        %v594 = vrsqrt.pop %v494
        %v595 = vrsqrt.pop %v497
        %v596 = vrsqrt.pop %v500
        %v597 = vrsqrt.pop %v503
        %v598 = vrsqrt.pop %v506
        %v599 = vrsqrt.pop %v509
        %v600 = vrsqrt.pop %v512
        %v601 = vrsqrt.pop %v515
        %v602 = vrsqrt.pop %v518
        %v603 = vrsqrt.pop %v521
        %v604 = vrsqrt.pop %v524
        %v605 = vrsqrt.pop %v527
        %v606 = vrsqrt.pop %v530
        %v607 = vrsqrt.pop %v533
        %v608 = vrsqrt.pop %v536
        %v609 = vrsqrt.pop %v539
        %v610 = vrsqrt.pop %v542
        %v611 = vrsqrt.pop %v545
        %v612 = vrsqrt.pop %v548
        %v613 = vmin.f32 %v549, 1e+12
        %v614 = vmin.f32 %v550, 1e+12
        %v615 = vmin.f32 %v551, 1e+12
        %v616 = vmin.f32 %v552, 1e+12
        %v617 = vmin.f32 %v553, 1e+12
        %v618 = vmin.f32 %v554, 1e+12
        %v619 = vmin.f32 %v555, 1e+12
        %v620 = vmin.f32 %v556, 1e+12
        %v621 = vmin.f32 %v557, 1e+12
        %v622 = vmin.f32 %v558, 1e+12
        %v623 = vmin.f32 %v559, 1e+12
        %v624 = vmin.f32 %v560, 1e+12
        %v625 = vmin.f32 %v561, 1e+12
        %v626 = vmin.f32 %v562, 1e+12
        %v627 = vmin.f32 %v563, 1e+12
        %v628 = vmin.f32 %v564, 1e+12
        %v629 = vmin.f32 %v565, 1e+12
        %v630 = vmin.f32 %v566, 1e+12
        %v631 = vmin.f32 %v567, 1e+12
        %v632 = vmin.f32 %v568, 1e+12
        %v633 = vmin.f32 %v569, 1e+12
        %v634 = vmin.f32 %v570, 1e+12
        %v635 = vmin.f32 %v571, 1e+12
        %v636 = vmin.f32 %v572, 1e+12
        %v637 = vmin.f32 %v573, 1e+12
        %v638 = vmin.f32 %v574, 1e+12
        %v639 = vmin.f32 %v575, 1e+12
        %v640 = vmin.f32 %v576, 1e+12
        %v641 = vmin.f32 %v577, 1e+12
        %v642 = vmin.f32 %v578, 1e+12
        %v643 = vmin.f32 %v579, 1e+12
        %v644 = vmin.f32 %v580, 1e+12
        %v645 = vmin.f32 %v581, 1e+12
        %v646 = vmin.f32 %v582, 1e+12
        %v647 = vmin.f32 %v583, 1e+12
        %v648 = vmin.f32 %v584, 1e+12
        %v649 = vmin.f32 %v585, 1e+12
        %v650 = vmin.f32 %v586, 1e+12
        %v651 = vmin.f32 %v587, 1e+12
        %v652 = vmin.f32 %v588, 1e+12
        %v653 = vmin.f32 %v589, 1e+12
        %v654 = vmin.f32 %v590, 1e+12
        %v655 = vmin.f32 %v591, 1e+12
        %v656 = vmin.f32 %v592, 1e+12
        %v657 = vmin.f32 %v593, 1e+12
        %v658 = vmin.f32 %v594, 1e+12
        %v659 = vmin.f32 %v595, 1e+12
        %v660 = vmin.f32 %v596, 1e+12
        %v661 = vmin.f32 %v597, 1e+12
        %v662 = vmin.f32 %v598, 1e+12
        %v663 = vmin.f32 %v599, 1e+12
        %v664 = vmin.f32 %v600, 1e+12
        %v665 = vmin.f32 %v601, 1e+12
        %v666 = vmin.f32 %v602, 1e+12
        %v667 = vmin.f32 %v603, 1e+12
        %v668 = vmin.f32 %v604, 1e+12
        %v669 = vmin.f32 %v605, 1e+12
        %v670 = vmin.f32 %v606, 1e+12
        %v671 = vmin.f32 %v607, 1e+12
        %v672 = vmin.f32 %v608, 1e+12
        %v673 = vmin.f32 %v609, 1e+12
        %v674 = vmin.f32 %v610, 1e+12
        %v675 = vmin.f32 %v611, 1e+12
        %v676 = vmin.f32 %v612, 1e+12
        %v677 = vmul.f32 %v220, %v292
        %v678 = vmul.f32 %v221, %v613
        %v679 = vmul.f32 %v222, %v614
        %v680 = vmul.f32 %v223, %v615
        %v681 = vmul.f32 %v224, %v616
        %v682 = vmul.f32 %v225, %v617
        %v683 = vmul.f32 %v226, %v618
        %v684 = vmul.f32 %v227, %v619
        %v685 = vmul.f32 %v228, %v620
        %v686 = vmul.f32 %v229, %v621
        %v687 = vmul.f32 %v230, %v622
        %v688 = vmul.f32 %v231, %v623
        %v689 = vmul.f32 %v232, %v624
        %v690 = vmul.f32 %v233, %v625
        %v691 = vmul.f32 %v234, %v626
        %v692 = vmul.f32 %v235, %v627
        %v693 = vmul.f32 %v236, %v628
        %v694 = vmul.f32 %v237, %v629
        %v695 = vmul.f32 %v238, %v630
        %v696 = vmul.f32 %v239, %v631
        %v697 = vmul.f32 %v240, %v632
        %v698 = vmul.f32 %v241, %v633
        %v699 = vmul.f32 %v242, %v634
        %v700 = vmul.f32 %v243, %v635
        %v701 = vmul.f32 %v244, %v636
        %v702 = vmul.f32 %v245, %v637
        %v703 = vmul.f32 %v246, %v638
        %v704 = vmul.f32 %v247, %v639
        %v705 = vmul.f32 %v248, %v640
        %v706 = vmul.f32 %v249, %v641
        %v707 = vmul.f32 %v250, %v642
        %v708 = vmul.f32 %v251, %v643
        %v709 = vmul.f32 %v252, %v644
        %v710 = vmul.f32 %v253, %v645
        %v711 = vmul.f32 %v254, %v646
        %v712 = vmul.f32 %v255, %v647
        %v713 = vmul.f32 %v256, %v648
        %v714 = vmul.f32 %v257, %v649
        %v715 = vmul.f32 %v258, %v650
        %v716 = vmul.f32 %v259, %v651
        %v717 = vmul.f32 %v260, %v652
        %v718 = vmul.f32 %v261, %v653
        %v719 = vmul.f32 %v262, %v654
        %v720 = vmul.f32 %v263, %v655
        %v721 = vmul.f32 %v264, %v656
        %v722 = vmul.f32 %v265, %v657
        %v723 = vmul.f32 %v266, %v658
        %v724 = vmul.f32 %v267, %v659
        %v725 = vmul.f32 %v268, %v660
        %v726 = vmul.f32 %v269, %v661
        %v727 = vmul.f32 %v270, %v662
        %v728 = vmul.f32 %v271, %v663
        %v729 = vmul.f32 %v272, %v664
        %v730 = vmul.f32 %v273, %v665
        %v731 = vmul.f32 %v274, %v666
        %v732 = vmul.f32 %v275, %v667
        %v733 = vmul.f32 %v276, %v668
        %v734 = vmul.f32 %v277, %v669
        %v735 = vmul.f32 %v278, %v670
        %v736 = vmul.f32 %v279, %v671
        %v737 = vmul.f32 %v280, %v672
        %v738 = vmul.f32 %v281, %v673
        %v739 = vmul.f32 %v282, %v674
        %v740 = vmul.f32 %v283, %v675
        %v741 = vmul.f32 %v284, %v676
        %v743 = vsel %vm287, %v677, 0
        %v746 = vsel %vm287, %v678, 0
        %v749 = vsel %vm287, %v679, 0
        %v752 = vsel %vm287, %v680, 0
        %v755 = vsel %vm287, %v681, 0
        %v758 = vsel %vm287, %v682, 0
        %v761 = vsel %vm287, %v683, 0
        %v764 = vsel %vm287, %v684, 0
        %v767 = vsel %vm287, %v685, 0
        %v770 = vsel %vm287, %v686, 0
        %v773 = vsel %vm287, %v687, 0
        %v776 = vsel %vm287, %v688, 0
        %v779 = vsel %vm287, %v689, 0
        %v782 = vsel %vm287, %v690, 0
        %v785 = vsel %vm287, %v691, 0
        %v788 = vsel %vm287, %v692, 0
        %v791 = vsel %vm287, %v693, 0
        %v794 = vsel %vm287, %v694, 0
        %v797 = vsel %vm287, %v695, 0
        %v800 = vsel %vm287, %v696, 0
        %v803 = vsel %vm287, %v697, 0
        %v806 = vsel %vm287, %v698, 0
        %v809 = vsel %vm287, %v699, 0
        %v812 = vsel %vm287, %v700, 0
        %v815 = vsel %vm287, %v701, 0
        %v818 = vsel %vm287, %v702, 0
        %v821 = vsel %vm287, %v703, 0
        %v824 = vsel %vm287, %v704, 0
        %v827 = vsel %vm287, %v705, 0
        %v830 = vsel %vm287, %v706, 0
        %v833 = vsel %vm287, %v707, 0
        %v836 = vsel %vm287, %v708, 0
        %v839 = vsel %vm287, %v709, 0
        %v842 = vsel %vm287, %v710, 0
        %v845 = vsel %vm287, %v711, 0
        %v848 = vsel %vm287, %v712, 0
        %v851 = vsel %vm287, %v713, 0
        %v854 = vsel %vm287, %v714, 0
        %v857 = vsel %vm287, %v715, 0
        %v860 = vsel %vm287, %v716, 0
        %v863 = vsel %vm287, %v717, 0
        %v866 = vsel %vm287, %v718, 0
        %v869 = vsel %vm287, %v719, 0
        %v872 = vsel %vm287, %v720, 0
        %v875 = vsel %vm287, %v721, 0
        %v878 = vsel %vm287, %v722, 0
        %v881 = vsel %vm287, %v723, 0
        %v884 = vsel %vm287, %v724, 0
        %v887 = vsel %vm287, %v725, 0
        %v890 = vsel %vm287, %v726, 0
        %v893 = vsel %vm287, %v727, 0
        %v896 = vsel %vm287, %v728, 0
        %v899 = vsel %vm287, %v729, 0
        %v902 = vsel %vm287, %v730, 0
        %v905 = vsel %vm287, %v731, 0
        %v908 = vsel %vm287, %v732, 0
        %v911 = vsel %vm287, %v733, 0
        %v914 = vsel %vm287, %v734, 0
        %v917 = vsel %vm287, %v735, 0
        %v920 = vsel %vm287, %v736, 0
        %v923 = vsel %vm287, %v737, 0
        %v926 = vsel %vm287, %v738, 0
        %v929 = vsel %vm287, %v739, 0
        %v932 = vsel %vm287, %v740, 0
        %v935 = vsel %vm287, %v741, 0
        %937 = vmatprep.subr.mxu0 0.0
        %938 = vmatpush1.xpose.msra.mxu0 %v746
        %939 = vmatprep.subr.mxu0 0.0
        %940 = vmatpush1.xpose.msra.mxu0 %v749
        %941 = vmatprep.subr.mxu0 0.0
        %942 = vmatpush1.xpose.msra.mxu0 %v752
        %943 = vmatprep.subr.mxu0 0.0
        %944 = vmatpush1.xpose.msra.mxu0 %v755
        %945 = vmatprep.subr.mxu0 0.0
        %946 = vmatpush1.xpose.msra.mxu0 %v758
        %947 = vmatprep.subr.mxu0 0.0
        %948 = vmatpush1.xpose.msra.mxu0 %v761
        %949 = vmatprep.subr.mxu0 0.0
        %950 = vmatpush1.xpose.msra.mxu0 %v764
        %951 = vmatprep.subr.mxu0 0.0
        %952 = vmatpush1.xpose.msra.mxu0 %v767
        %953 = vmatprep.subr.mxu0 0.0
        %954 = vmatpush1.xpose.msra.mxu0 %v770
        %955 = vmatprep.subr.mxu0 0.0
        %956 = vmatpush1.xpose.msra.mxu0 %v773
        %957 = vmatprep.subr.mxu0 0.0
        %958 = vmatpush1.xpose.msra.mxu0 %v776
        %959 = vmatprep.subr.mxu0 0.0
        %960 = vmatpush1.xpose.msra.mxu0 %v779
        %961 = vmatprep.subr.mxu0 0.0
        %962 = vmatpush1.xpose.msra.mxu0 %v782
        %963 = vmatprep.subr.mxu0 0.0
        %964 = vmatpush1.xpose.msra.mxu0 %v785
        %965 = vmatprep.subr.mxu0 0.0
        %966 = vmatpush1.xpose.msra.mxu0 %v788
        %967 = vmatprep.subr.mxu0 0.0
        %968 = vmatpush1.xpose.msra.mxu0 %v791
        %969 = vmatprep.subr.mxu0 0.0
        %970 = vmatpush1.xpose.msra.mxu0 %v794
        %971 = vmatprep.subr.mxu0 0.0
        %972 = vmatpush1.xpose.msra.mxu0 %v797
        %973 = vmatprep.subr.mxu0 0.0
        %974 = vmatpush1.xpose.msra.mxu0 %v800
        %975 = vmatprep.subr.mxu0 0.0
        %976 = vmatpush1.xpose.msra.mxu0 %v803
        %977 = vmatprep.subr.mxu0 0.0
        %978 = vmatpush1.xpose.msra.mxu0 %v806
        %979 = vmatprep.subr.mxu0 0.0
        %980 = vmatpush1.xpose.msra.mxu0 %v809
        %981 = vmatprep.subr.mxu0 0.0
        %982 = vmatpush1.xpose.msra.mxu0 %v812
        %983 = vmatprep.subr.mxu0 0.0
        %984 = vmatpush1.xpose.msra.mxu0 %v815
        %985 = vmatprep.subr.mxu0 0.0
        %986 = vmatpush1.xpose.msra.mxu0 %v818
        %987 = vmatprep.subr.mxu0 0.0
        %988 = vmatpush1.xpose.msra.mxu0 %v821
        %989 = vmatprep.subr.mxu0 0.0
        %990 = vmatpush1.xpose.msra.mxu0 %v824
        %991 = vmatprep.subr.mxu0 0.0
        %992 = vmatpush1.xpose.msra.mxu0 %v827
        %993 = vmatprep.subr.mxu0 0.0
        %994 = vmatpush1.xpose.msra.mxu0 %v830
        %995 = vmatprep.subr.mxu0 0.0
        %996 = vmatpush1.xpose.msra.mxu0 %v833
        %997 = vmatprep.subr.mxu0 0.0
        %998 = vmatpush1.xpose.msra.mxu0 %v836
        %999 = vmatprep.subr.mxu0 0.0
        %1000 = vmatpush1.xpose.msra.mxu0 %v839
        %1001 = vmatprep.mubr.f32.mxu0 0.0
        %1002 = vmatmul.mubr.f32.gmra.mrb[0].mxu0 %v743
        %v1003 = vpop.f32.mrb[0].mxu0
        %v1004 = vadd.f32 0.0, %v1003
        %v1005 = vpop.f32.mrb[0].mxu0
        %v1006 = vadd.f32 0.0, %v1005
        %1007 = vdwg.mxu0
        %1008 = vmatprep.subr.mxu0 0.0
        %1009 = vmatpush1.xpose.msra.mxu0 %v842
        %1010 = vmatprep.subr.mxu0 0.0
        %1011 = vmatpush1.xpose.msra.mxu0 %v845
        %1012 = vmatprep.subr.mxu0 0.0
        %1013 = vmatpush1.xpose.msra.mxu0 %v848
        %1014 = vmatprep.subr.mxu0 0.0
        %1015 = vmatpush1.xpose.msra.mxu0 %v851
        %1016 = vmatprep.subr.mxu0 0.0
        %1017 = vmatpush1.xpose.msra.mxu0 %v854
        %1018 = vmatprep.subr.mxu0 0.0
        %1019 = vmatpush1.xpose.msra.mxu0 %v857
        %1020 = vmatprep.subr.mxu0 0.0
        %1021 = vmatpush1.xpose.msra.mxu0 %v860
        %1022 = vmatprep.subr.mxu0 0.0
        %1023 = vmatpush1.xpose.msra.mxu0 %v863
        %1024 = vmatprep.subr.mxu0 0.0
        %1025 = vmatpush1.xpose.msra.mxu0 %v866
        %1026 = vmatprep.subr.mxu0 0.0
        %1027 = vmatpush1.xpose.msra.mxu0 %v869
        %1028 = vmatprep.subr.mxu0 0.0
        %1029 = vmatpush1.xpose.msra.mxu0 %v872
        %1030 = vmatprep.subr.mxu0 0.0
        %1031 = vmatpush1.xpose.msra.mxu0 %v875
        %1032 = vmatprep.subr.mxu0 0.0
        %1033 = vmatpush1.xpose.msra.mxu0 %v878
        %1034 = vmatprep.subr.mxu0 0.0
        %1035 = vmatpush1.xpose.msra.mxu0 %v881
        %1036 = vmatprep.subr.mxu0 0.0
        %1037 = vmatpush1.xpose.msra.mxu0 %v884
        %1038 = vmatprep.subr.mxu0 0.0
        %1039 = vmatpush1.xpose.msra.mxu0 %v887
        %1040 = vmatprep.subr.mxu0 0.0
        %1041 = vmatpush1.xpose.msra.mxu0 %v890
        %1042 = vmatprep.subr.mxu0 0.0
        %1043 = vmatpush1.xpose.msra.mxu0 %v893
        %1044 = vmatprep.subr.mxu0 0.0
        %1045 = vmatpush1.xpose.msra.mxu0 %v896
        %1046 = vmatprep.subr.mxu0 0.0
        %1047 = vmatpush1.xpose.msra.mxu0 %v899
        %1048 = vmatprep.subr.mxu0 0.0
        %1049 = vmatpush1.xpose.msra.mxu0 %v902
        %1050 = vmatprep.subr.mxu0 0.0
        %1051 = vmatpush1.xpose.msra.mxu0 %v905
        %1052 = vmatprep.subr.mxu0 0.0
        %1053 = vmatpush1.xpose.msra.mxu0 %v908
        %1054 = vmatprep.subr.mxu0 0.0
        %1055 = vmatpush1.xpose.msra.mxu0 %v911
        %1056 = vmatprep.subr.mxu0 0.0
        %1057 = vmatpush1.xpose.msra.mxu0 %v914
        %1058 = vmatprep.subr.mxu0 0.0
        %1059 = vmatpush1.xpose.msra.mxu0 %v917
        %1060 = vmatprep.subr.mxu0 0.0
        %1061 = vmatpush1.xpose.msra.mxu0 %v920
        %1062 = vmatprep.subr.mxu0 0.0
        %1063 = vmatpush1.xpose.msra.mxu0 %v923
        %1064 = vmatprep.subr.mxu0 0.0
        %1065 = vmatpush1.xpose.msra.mxu0 %v926
        %1066 = vmatprep.subr.mxu0 0.0
        %1067 = vmatpush1.xpose.msra.mxu0 %v929
        %1068 = vmatprep.subr.mxu0 0.0
        %1069 = vmatpush1.xpose.msra.mxu0 %v932
        %1070 = vmatprep.subr.mxu0 0.0
        %1071 = vmatpush1.xpose.msra.mxu0 %v935
        %1072 = vmatprep.mubr.f32.mxu0 0.0
        %1073 = vmatmul.mubr.f32.gmra.mrb[0].mxu0 %v743
        %v1074 = vpop.f32.mrb[0].mxu0
        %v1075 = vadd.f32 0.0, %v1074
        %v1076 = vpop.f32.mrb[0].mxu0
        %v1077 = vadd.f32 0.0, %v1076
        %1078 = vdwg.mxu0
        %v1079 = vmax.f32 %v1004, -0.99999
        %v1080 = vmax.f32 %v1006, -0.99999
        %v1081 = vmax.f32 %v1075, -0.99999
        %v1082 = vmax.f32 %v1077, -0.99999
        %v1083 = vmin.f32 %v1079, 0.99999
        %v1084 = vmin.f32 %v1080, 0.99999
        %v1085 = vmin.f32 %v1081, 0.99999
        %v1086 = vmin.f32 %v1082, 0.99999
        %v1087 = vlaneseq
        %v1088 = vand.u32 %v1087, 127
        %v1089 = vadd.s32 %v1088, 128
        %v1090 = vadd.s32 %v1088, 256
        %v1091 = vadd.s32 %v1088, 384
        %s1092 = smul.u32 %s22, 512
        %v1093 = vstv %s1092
        %v1094 = vsub.s32 %v285, %v1093
        %1095 = vset.pattern.permute.xlu0 0
        %1096 = vperm.xlu0 %1095, %v1094
        %v1097 = vpop.permute.xlu0 %1096
        %vm1098 = vcmp.eq.s32.totalorder %v1088, %v1097
        %vm1099 = vcmp.eq.s32.totalorder %v1089, %v1097
        %vm1100 = vcmp.eq.s32.totalorder %v1090, %v1097
        %vm1101 = vcmp.eq.s32.totalorder %v1091, %v1097
        %v1102 = vsel %vm1098, %v1083, 0.0
        %v1103 = vsel %vm1099, %v1084, 0.0
        %v1104 = vsel %vm1100, %v1085, 0.0
        %v1105 = vsel %vm1101, %v1086, 0.0
        %v1106 = vadd.f32 %v1102, %v1103
        %v1107 = vadd.f32 %v1106, %v1104
        %v1108 = vadd.f32 %v1107, %v1105
        %1109 = vadd.xlane.f32.xlu0 %v1108
        %v1110 = vpop.xlane.xlu0 %1109
        %v1111 = vmul.f32 %v1110, 0.87758255
        %v1112 = vmul.f32 %v1110, %v1110
        %v1113 = vsub.f32 1.0, %v1112
        %v1114 = vadd.f32 %v1113, 1e-07
        %v1115 = vrsqrt.pop %v1114
        %v1116 = vmul.f32 %v1114, %v1115
        %vm1117 = vcmp.eq.f32.partialorder %v1114, inf
        %v1118 = vsel %vm1117, %v1114, %v1116
        %vm1119 = vcmp.eq.f32.partialorder %v1114, 0.0
        %v1120 = vand.u32 %v1114, 2147483648
        %v1121 = vsel %vm1119, %v1120, %v1118
        %v1122 = vmul.f32 %v1121, 0.47942555
        %v1123 = vsub.f32 %v1111, %v1122
        %v1124 = vsel %vm1098, %v1123, %v1083
        %v1125 = vsel %vm1099, %v1123, %v1084
        %v1126 = vsel %vm1100, %v1123, %v1085
        %v1127 = vsel %vm1101, %v1123, %v1086
        %v1128 = vmul.f32 %v1124, 64.0
        %v1129 = vmul.f32 %v1125, 64.0
        %v1130 = vmul.f32 %v1126, 64.0
        %v1131 = vmul.f32 %v1127, 64.0
        %1132 = vst [vmem:[%s204] sm:$0xff] %v1128
        %1133 = vst [vmem:[%s204 + $0x8] sm:$0xff] %v1129
        %1134 = vst [vmem:[%s204 + $0x10] sm:$0xff] %v1130
        %1135 = vst [vmem:[%s204 + $0x18] sm:$0xff] %v1131
        %s1136 = sand.u32 %s117, 1
        %s1137 = scalar_lea.sflag [#allocation3], %s1136
        %s1138 = sand.u32 %s117, 1
        %s1139 = smul.addr %s1138, 32
        %s1140 = scalar_lea.vmem [#allocation2], %s1139
        // Predicated region
        $region33: #{tpu_custom_call.1} parent=31 // pred_check
          %p1141 = pneg %p127
        $region34: #{tpu_custom_call.1} parent=31 // pred_check_branch
          %1143 = sbr.rel (%p1141) target = $region36
        $region35: #{tpu_custom_call.1} parent=31 // pred_region
          %s1144 = smul.u32 4, %s22
          %s1146 = ssub.s32 512, 512
          %1147 = vsyncadd %s1137, %s1146
          %s1148 = smul.addr %s21, 8
          %s1149 = sadd.s32 %s1144, %s1148
          %s1150 = smul.addr %s1149, 128
          %s1151 = scalar_lea.hbm %s3, %s1150
          %s1153 = sshll.u32 %s1140, 4
          %s1154 = int_to_ptr.vmem [resolvable:$true] %s1153
          %1156 = dma.vmem_to_hbm [thread:$0]  %s1154, 512, %s1151, %s1137
        $region36: #{tpu_custom_call.1} parent=31 // pred_fallthru
          _
      $region32: #{tpu_custom_call.1} parent=5 // pred_fallthru
        _
      %p1157 = scmp.le.s32.totalorder 2, %s12
      // Predicated region
      $region37: #{tpu_custom_call.1} parent=5 // pred_check
        %p1158 = pneg %p1157
      $region38: #{tpu_custom_call.1} parent=5 // pred_check_branch
        %1160 = sbr.rel (%p1158) target = $region40
      $region39: #{tpu_custom_call.1} parent=5 // pred_region
        %s1161 = ssub.s32 %s12, 2
        // Predicated region
        $region41: #{tpu_custom_call.1} parent=39 // pred_check
          %p1162 = pneg %p133
        $region42: #{tpu_custom_call.1} parent=39 // pred_check_branch
          %1164 = sbr.rel (%p1162) target = $region44
        $region43: #{tpu_custom_call.1} parent=39 // pred_region
          %s1165 = sand.u32 %s118, 1
          %s1166 = scalar_lea.sflag [#allocation3], %s1165
          %s1167 = sand.u32 %s118, 1
          %s1168 = smul.addr %s1167, 32
          %s1169 = scalar_lea.vmem [#allocation2], %s1168
          %1170 = dma.done %s1166, 512
        $region44: #{tpu_custom_call.1} parent=39 // pred_fallthru
          _
      $region40: #{tpu_custom_call.1} parent=5 // pred_fallthru
        _
    $region6: #{tpu_custom_call.1} parent=1 // loop_footer
      %s16 = sadd.s32 1, %s12
    $region7: #{tpu_custom_call.1} parent=1 // loop_footer_branch
      %11 = sbr.rel target = $region3
    $region8: #{tpu_custom_call.1} parent=1 // loop_exit
      _
    %1171 = vsyncpa [#allocation3], 1
    %s1172 = scalar_lea.sflag [#allocation3], 1
    %1173 = vsyncpa %s1172, 1

</llo_original>
